<compile_context>
chip_gen: v7x
topology: tpu7x:2x2x1
jax: 0.10.0
libtpu: 0.0.40
codegen_flags: <defaults>
</compile_context>

<pallas_src>
import jax
import jax.numpy as jnp
from jax.experimental import pallas as pl
from jax.experimental.pallas import tpu as pltpu


def _remainder_kernel(x_ref, w_ref, params_ref, coeff_ref, out_ref):
    # x_ref:      [TB, IC]        flattened input tile (native dtype)
    # w_ref:      [IC, ND]        PCA weight, columns pre-replicated per-dof (w @ rep)
    # params_ref: [8, ND] f32     row 0: b_rep, 1: aL, 2: bL, 3: aR, 4: bR (rows 5-7 pad)
    # coeff_ref:  [ND, OUT_PAD]   LagHead coefficients, (component, dof) flattened, lane-padded
    # out_ref:    [TB, OUT_PAD]

    # --- SigmoidNormalization (replication folded into the weight): one MXU pass + EUP ---
    z = jnp.dot(x_ref[...], w_ref[...], preferred_element_type=jnp.float32) + params_ref[0:1, :]
    s_rep = jax.nn.sigmoid(z)                                        # [TB, ND] f32

    # --- LagEncoder hat basis: pure full-row VPU ops (no lane shuffles, no concat) ---
    left = jnp.maximum(params_ref[1:2, :] * s_rep + params_ref[2:3, :], 0.0)
    right = jnp.maximum(params_ref[3:4, :] * s_rep + params_ref[4:5, :], 0.0)
    phi = jnp.minimum(left, right)                                   # [TB, ND] f32

    # --- LagHead: einsum('bid,ido->bo') == flattened matmul (lane-dense padded output) ---
    out_ref[...] = jnp.dot(phi, coeff_ref[...], preferred_element_type=jnp.float32)


def remainder_forward(x, w, b, bin_edges, coeff, *, block_b=512):
    """x: [B,C,H,W]; w: [IC,N] (pre-transposed torch Linear weight); b: [N];
    bin_edges: [N,DOF]; coeff: [N,DOF,OUT].  Matmul runs in x's native dtype
    (f32 by default, exactly matching the PyTorch module); accumulation is f32."""
    f32 = jnp.float32
    B = x.shape[0]
    x_flat = x.reshape(B, -1)
    IC, N = w.shape
    N2, DOF, OUT = coeff.shape
    assert N2 == N and bin_edges.shape == (N, DOF)
    ND = N * DOF
    OUT_PAD = ((OUT + 127) // 128) * 128
    LARGE = jnp.float32(1e30)

    # ---- hoisted, loop-invariant hat-basis affine parameters (f32, computed once) ----
    edges = bin_edges.astype(f32)                                    # [N, DOF]
    inv_w = 1.0 / (edges[:, 1:] - edges[:, :-1])                     # [N, DOF-1]
    d = jnp.arange(DOF)
    dm1 = jnp.clip(d - 1, 0, DOF - 2)
    dcl = jnp.clip(d, 0, DOF - 2)
    dp1 = jnp.clip(d + 1, 0, DOF - 1)
    has_left = (d > 0)[None, :]
    has_right = (d < DOF - 1)[None, :]
    #  left(d)  = inv_w[d-1] * relu(s - e[d-1])  == relu(aL*s + bL)
    #  right(d) = inv_w[d]   * relu(e[d+1] - s)  == relu(aR*s + bR)
    #  basis(d) = min(left, right); boundary columns get LARGE on the missing side.
    aL = jnp.where(has_left, inv_w[:, dm1], 0.0)
    bL = jnp.where(has_left, -inv_w[:, dm1] * edges[:, dm1], LARGE)
    aR = jnp.where(has_right, -inv_w[:, dcl], 0.0)
    bR = jnp.where(has_right, inv_w[:, dcl] * edges[:, dp1], LARGE)

    # ---- fold the DOF-replication into the PCA weight & bias (deletes a dependent MXU pass) --
    w_rep = jnp.repeat(w.astype(f32), DOF, axis=1).astype(x_flat.dtype)   # [IC, ND]
    b_rep = jnp.repeat(b.astype(f32), DOF)                                # [ND]

    # ---- single packed constant block: [8, ND] (sublane-aligned, one BlockSpec / DMA) ----
    params = jnp.zeros((8, ND), dtype=f32)
    params = params.at[0].set(b_rep)
    params = params.at[1].set(aL.reshape(ND).astype(f32))
    params = params.at[2].set(bL.reshape(ND).astype(f32))
    params = params.at[3].set(aR.reshape(ND).astype(f32))
    params = params.at[4].set(bR.reshape(ND).astype(f32))

    coeff_pad = jnp.pad(coeff.reshape(ND, OUT).astype(f32),
                        ((0, 0), (0, OUT_PAD - OUT)))                # lane-dense output

    # ---- batch tiling: single program for small B; even, balanced block count otherwise
    #      (keeps both v7x TensorCores busy via the parallel grid axis; neutral on v5e/v6e) ----
    if B <= block_b:
        TB, n_blocks = B, 1
    else:
        n_blocks = pl.cdiv(B, block_b)
        if n_blocks % 2:
            n_blocks += 1                                            # even -> 2-TC balance
        TB = ((-(-B // n_blocks)) + 7) // 8 * 8                      # sublane-aligned tile
    B_pad = TB * n_blocks
    if B_pad != B:
        x_flat = jnp.pad(x_flat, ((0, B_pad - B), (0, 0)))

    x_bytes = x_flat.dtype.itemsize
    vmem_needed = 2 * (TB * IC * x_bytes + TB * OUT_PAD * 4
                       + IC * ND * w_rep.dtype.itemsize + 8 * ND * 4 + ND * OUT_PAD * 4)
    compiler_kwargs = dict(dimension_semantics=("parallel",))
    if vmem_needed > (30 << 20):       # only needed if someone cranks block_b very high
        compiler_kwargs["vmem_limit_bytes"] = min(int(vmem_needed * 1.25) + (1 << 20), 100 << 20)

    cost = pl.CostEstimate(
        flops=int(2 * B_pad * IC * ND + 2 * B_pad * ND * OUT_PAD),
        transcendentals=int(B_pad * ND),
        bytes_accessed=int(B_pad * IC * x_bytes + B_pad * OUT_PAD * 4
                           + IC * ND * w_rep.dtype.itemsize + 8 * ND * 4 + ND * OUT_PAD * 4),
    )

    fixed = lambda i: (0, 0)
    out = pl.pallas_call(
        _remainder_kernel,
        out_shape=jax.ShapeDtypeStruct((B_pad, OUT_PAD), jnp.float32),
        grid=(n_blocks,),
        in_specs=[
            pl.BlockSpec((TB, IC), lambda i: (i, 0)),                # x tile (streams over HBM)
            pl.BlockSpec((IC, ND), fixed),                           # replicated PCA weight
            pl.BlockSpec((8, ND), fixed),                            # packed constants
            pl.BlockSpec((ND, OUT_PAD), fixed),                      # LagHead coefficients
        ],
        out_specs=pl.BlockSpec((TB, OUT_PAD), lambda i: (i, 0)),
        compiler_params=pltpu.CompilerParams(**compiler_kwargs),
        cost_estimate=cost,
    )(x_flat, w_rep, params, coeff_pad)

    return out[:B, :OUT]


def remainder_reference(x, w, b, bin_edges, coeff):
    """Pure-JAX reference mirroring the PyTorch forward."""
    B = x.shape[0]
    xf = x.reshape(B, -1)
    s = jax.nn.sigmoid(xf @ w + b[None, :])
    offset = s[:, :, None] - bin_edges[None, :, :]
    scale = 1.0 / (bin_edges[None, :, 1:] - bin_edges[None, :, :-1])
    left = scale * jax.nn.relu(offset[:, :, :-1])
    right = scale * jax.nn.relu(-offset[:, :, 1:])
    basis = jnp.concatenate(
        [right[:, :, 0:1], jnp.minimum(left[:, :, :-1], right[:, :, 1:]), left[:, :, -1:]],
        axis=2)
    return jnp.einsum('bid,ido->bo', basis, coeff)


if __name__ == "__main__":
    # Module hyper-parameters (small, consistent with the forward pass).
    B, C, H, W_sp = 2, 4, 16, 16
    in_channels = C * H * W_sp
    n_components = 8
    out_channels = 10
    dof = 9

    key = jax.random.PRNGKey(0)
    k_x, k_w, k_b, k_c, k_x2 = jax.random.split(key, 5)

    x = jax.random.normal(k_x, (B, C, H, W_sp), dtype=jnp.float32)
    # torch init for LagHead.coeff is zeros; use small random values so the check is non-trivial.
    w = 0.02 * jax.random.normal(k_w, (in_channels, n_components), dtype=jnp.float32)
    b = 0.1 * jax.random.normal(k_b, (n_components,), dtype=jnp.float32)
    coeff = 0.1 * jax.random.normal(k_c, (n_components, dof, out_channels), dtype=jnp.float32)
    bin_edges = jnp.tile(jnp.linspace(-1.0, 1.0, dof, dtype=jnp.float32)[None, :],
                         (n_components, 1))

    # small-batch (single-program) path
    out = jax.block_until_ready(remainder_forward(x, w, b, bin_edges, coeff))
    ref = jax.block_until_ready(remainder_reference(x, w, b, bin_edges, coeff))
    assert out.shape == (B, out_channels)
    if not jnp.allclose(out, ref, atol=2e-3, rtol=2e-3):
        raise AssertionError(f"mismatch (B=2): max abs err {float(jnp.max(jnp.abs(out - ref)))}")

    # batched path exercising the even, balanced parallel batch grid (2 TCs on v7x)
    B2 = 200
    x2 = jax.random.normal(k_x2, (B2, C, H, W_sp), dtype=jnp.float32)
    out2 = jax.block_until_ready(remainder_forward(x2, w, b, bin_edges, coeff, block_b=64))
    ref2 = jax.block_until_ready(remainder_reference(x2, w, b, bin_edges, coeff))
    assert out2.shape == (B2, out_channels)
    if not jnp.allclose(out2, ref2, atol=2e-3, rtol=2e-3):
        raise AssertionError(f"mismatch (B=200): max abs err {float(jnp.max(jnp.abs(out2 - ref2)))}")

    print("KERNEL_OK")
</pallas_src>

<mosaic_0001>
module attributes {stable_mosaic.version = 11 : i64} {
  func.func @_remainder_kernel(%arg0: i32, %arg1: memref<2x1024xf32, #tpu.memory_space<vmem>>, %arg2: memref<1024x72xf32, #tpu.memory_space<vmem>>, %arg3: memref<8x72xf32, #tpu.memory_space<vmem>>, %arg4: memref<72x128xf32, #tpu.memory_space<vmem>>, %arg5: memref<2x128xf32, #tpu.memory_space<vmem>>) attributes {dimension_semantics = [#tpu.dimension_semantics<parallel>], iteration_bounds = array<i64: 1>, scalar_prefetch = 0 : i64, scratch_operands = 0 : i64, tpu.core_type = #tpu.core_type<tc>, window_params = [{transform_indices = @transform_0, window_bounds = array<i64: 2, 1024>}, {pipeline_mode = #tpu.pipeline_mode<synchronous>, transform_indices = @transform_1, window_bounds = array<i64: 1024, 72>}, {pipeline_mode = #tpu.pipeline_mode<synchronous>, transform_indices = @transform_2, window_bounds = array<i64: 8, 72>}, {pipeline_mode = #tpu.pipeline_mode<synchronous>, transform_indices = @transform_3, window_bounds = array<i64: 72, 128>}, {transform_indices = @transform_4, window_bounds = array<i64: 2, 128>}]} {
    %c0 = arith.constant 0 : index
    %c0_0 = arith.constant 0 : index
    %0 = vector.load %arg1[%c0, %c0_0] : memref<2x1024xf32, #tpu.memory_space<vmem>>, vector<2x1024xf32>
    %c0_1 = arith.constant 0 : index
    %c0_2 = arith.constant 0 : index
    %1 = vector.load %arg2[%c0_1, %c0_2] : memref<1024x72xf32, #tpu.memory_space<vmem>>, vector<1024x72xf32>
    %cst = arith.constant dense<0.000000e+00> : vector<2x72xf32>
    %2 = tpu.matmul %0, %1, %cst {dimension_numbers = #tpu.dot_dimension_numbers<[1], [0], [0], [1], [0, 0, 1, 1], [], []>} : vector<2x1024xf32>, vector<1024x72xf32>, vector<2x72xf32> -> vector<2x72xf32>
    %c0_3 = arith.constant 0 : index
    %c0_4 = arith.constant 0 : index
    %3 = vector.load %arg3[%c0_3, %c0_4] : memref<8x72xf32, #tpu.memory_space<vmem>>, vector<1x72xf32>
    %4 = vector.broadcast %3 : vector<1x72xf32> to vector<2x72xf32>
    %5 = arith.addf %2, %4 : vector<2x72xf32>
    %6 = arith.negf %5 : vector<2x72xf32>
    %7 = math.exp %6 : vector<2x72xf32>
    %cst_5 = arith.constant 1.000000e+00 : f32
    %8 = vector.broadcast %cst_5 : f32 to vector<2x72xf32>
    %9 = arith.addf %8, %7 : vector<2x72xf32>
    %10 = arith.divf %8, %9 : vector<2x72xf32>
    %c1 = arith.constant 1 : index
    %c0_6 = arith.constant 0 : index
    %11 = vector.load %arg3[%c1, %c0_6] : memref<8x72xf32, #tpu.memory_space<vmem>>, vector<1x72xf32>
    %12 = vector.broadcast %11 : vector<1x72xf32> to vector<2x72xf32>
    %13 = arith.mulf %12, %10 : vector<2x72xf32>
    %c2 = arith.constant 2 : index
    %c0_7 = arith.constant 0 : index
    %14 = vector.load %arg3[%c2, %c0_7] : memref<8x72xf32, #tpu.memory_space<vmem>>, vector<1x72xf32>
    %15 = vector.broadcast %14 : vector<1x72xf32> to vector<2x72xf32>
    %16 = arith.addf %13, %15 : vector<2x72xf32>
    %cst_8 = arith.constant 0.000000e+00 : f32
    %17 = vector.broadcast %cst_8 : f32 to vector<2x72xf32>
    %18 = arith.maximumf %16, %17 : vector<2x72xf32>
    %c3 = arith.constant 3 : index
    %c0_9 = arith.constant 0 : index
    %19 = vector.load %arg3[%c3, %c0_9] : memref<8x72xf32, #tpu.memory_space<vmem>>, vector<1x72xf32>
    %20 = vector.broadcast %19 : vector<1x72xf32> to vector<2x72xf32>
    %21 = arith.mulf %20, %10 : vector<2x72xf32>
    %c4 = arith.constant 4 : index
    %c0_10 = arith.constant 0 : index
    %22 = vector.load %arg3[%c4, %c0_10] : memref<8x72xf32, #tpu.memory_space<vmem>>, vector<1x72xf32>
    %23 = vector.broadcast %22 : vector<1x72xf32> to vector<2x72xf32>
    %24 = arith.addf %21, %23 : vector<2x72xf32>
    %cst_11 = arith.constant 0.000000e+00 : f32
    %25 = vector.broadcast %cst_11 : f32 to vector<2x72xf32>
    %26 = arith.maximumf %24, %25 : vector<2x72xf32>
    %27 = arith.minimumf %18, %26 : vector<2x72xf32>
    %c0_12 = arith.constant 0 : index
    %c0_13 = arith.constant 0 : index
    %28 = vector.load %arg4[%c0_12, %c0_13] : memref<72x128xf32, #tpu.memory_space<vmem>>, vector<72x128xf32>
    %cst_14 = arith.constant dense<0.000000e+00> : vector<2x128xf32>
    %29 = tpu.matmul %27, %28, %cst_14 {dimension_numbers = #tpu.dot_dimension_numbers<[1], [0], [0], [1], [0, 0, 1, 1], [], []>} : vector<2x72xf32>, vector<72x128xf32>, vector<2x128xf32> -> vector<2x128xf32>
    %c0_15 = arith.constant 0 : index
    %c0_16 = arith.constant 0 : index
    %30 = vector.load %arg5[%c0_15, %c0_16] : memref<2x128xf32, #tpu.memory_space<vmem>>, vector<2x128xf32>
    tpu.vector_store %arg5[%c0_15, %c0_16], %29 {strides = array<i32>} : memref<2x128xf32, #tpu.memory_space<vmem>>, vector<2x128xf32>,
    return
  }
  func.func @transform_0(%arg0: i32) -> (i32, i32) {
    %c0_i32 = arith.constant 0 : i32
    %c0_i32_0 = arith.constant 0 : i32
    return %arg0, %c0_i32 : i32, i32
  }
  func.func @transform_1(%arg0: i32) -> (i32, i32) {
    %c0_i32 = arith.constant 0 : i32
    %c0_i32_0 = arith.constant 0 : i32
    %c0_i32_1 = arith.constant 0 : i32
    return %c0_i32, %c0_i32_0 : i32, i32
  }
  func.func @transform_2(%arg0: i32) -> (i32, i32) {
    %c0_i32 = arith.constant 0 : i32
    %c0_i32_0 = arith.constant 0 : i32
    %c0_i32_1 = arith.constant 0 : i32
    return %c0_i32, %c0_i32_0 : i32, i32
  }
  func.func @transform_3(%arg0: i32) -> (i32, i32) {
    %c0_i32 = arith.constant 0 : i32
    %c0_i32_0 = arith.constant 0 : i32
    %c0_i32_1 = arith.constant 0 : i32
    return %c0_i32, %c0_i32_0 : i32, i32
  }
  func.func @transform_4(%arg0: i32) -> (i32, i32) {
    %c0_i32 = arith.constant 0 : i32
    %c0_i32_0 = arith.constant 0 : i32
    return %arg0, %c0_i32 : i32, i32
  }
}

</mosaic_0001>

<llo_original>
// kernel: tpu_custom_call.1
$region0: #{tpu_custom_call.1}
  #allocation0 [shape = 'u32[]', space=smem, size = 0x4, offset = 0x4, fixed_abs, tag = 'smem constant byte address 0x4 - core index']
  #allocation1 [shape = 'u32[144,128]{1,0:T(1,128)}', space=vmem, size = 0x12000, scoped, tag = 'internal scratch']
  %s0 = inlined_call_operand.vmem [shape: f32[2,1024], index: 0, kind: input, shape index: {}]
  %s1 = inlined_call_operand.vmem [shape: f32[1024,72], index: 1, kind: input, shape index: {}]
  %s2 = inlined_call_operand.vmem [shape: f32[8,72], index: 2, kind: input, shape index: {}]
  %s3 = inlined_call_operand.vmem [shape: f32[72,128], index: 3, kind: input, shape index: {}]
  %s4 = inlined_call_operand.hbm [shape: f32[2,128], index: 4, kind: output, shape index: {}]
  %s5 = sld [smem:[#allocation0]]
  $region26: #{tpu_custom_call.1} parent=0
    _
  %s7 = ssub.s32 1, %s5
  %s8 = scalar_select 0, %s7, %s5
  $region1: #{tpu_custom_call.1} parent=0
    #allocation2 [shape = 'u8[1024]{0}', space=vmem, size = 0x400, scoped, tag = 'output window, operand 0, single buffered']
    #allocation3 [shape = 's32[1]{0}', space=sflag, size = 0x4, scoped, tag = 'scoped memory for tpu_custom_call.1']
    %9 = vsyncpa [#allocation3], 0
    // Predicated region
    $region2: #{tpu_custom_call.1} parent=1 // pred_check
      _
    $region3: #{tpu_custom_call.1} parent=1 // pred_check_branch
      %11 = sbr.rel (0) target = $region5
    $region4: #{tpu_custom_call.1} parent=1 // pred_region
      _
    $region5: #{tpu_custom_call.1} parent=1 // pred_fallthru
      _
    // Predicated region
    $region6: #{tpu_custom_call.1} parent=1 // pred_check
      _
    $region7: #{tpu_custom_call.1} parent=1 // pred_check_branch
      %13 = sbr.rel (0) target = $region9
    $region8: #{tpu_custom_call.1} parent=1 // pred_region
      _
    $region9: #{tpu_custom_call.1} parent=1 // pred_fallthru
      _
    // Predicated region
    $region10: #{tpu_custom_call.1} parent=1 // pred_check
      _
    $region11: #{tpu_custom_call.1} parent=1 // pred_check_branch
      %15 = sbr.rel (0) target = $region13
    $region12: #{tpu_custom_call.1} parent=1 // pred_region
      _
    $region13: #{tpu_custom_call.1} parent=1 // pred_fallthru
      _
    // Predicated region
    $region14: #{tpu_custom_call.1} parent=1 // pred_check
      _
    $region15: #{tpu_custom_call.1} parent=1 // pred_check_branch
      %17 = sbr.rel (0) target = $region17
    $region16: #{tpu_custom_call.1} parent=1 // pred_region
      _
    $region17: #{tpu_custom_call.1} parent=1 // pred_fallthru
      _
    %v18 = vld [vmem:[%s0] sm:$0xff]
    %v19 = vld [vmem:[%s0 + $0x8] sm:$0xff]
    %v20 = vld [vmem:[%s1] sm:$0xff]
    %v21 = vld [vmem:[%s1 + $0x8] sm:$0xff]
    %v22 = vld [vmem:[%s1 + $0x10] sm:$0xff]
    %v23 = vld [vmem:[%s1 + $0x18] sm:$0xff]
    %v24 = vld [vmem:[%s1 + $0x20] sm:$0xff]
    %v25 = vld [vmem:[%s1 + $0x28] sm:$0xff]
    %v26 = vld [vmem:[%s1 + $0x30] sm:$0xff]
    %v27 = vld [vmem:[%s1 + $0x38] sm:$0xff]
    %v28 = vld [vmem:[%s1 + $0x40] sm:$0xff]
    %v29 = vld [vmem:[%s1 + $0x48] sm:$0xff]
    %v30 = vld [vmem:[%s1 + $0x50] sm:$0xff]
    %v31 = vld [vmem:[%s1 + $0x58] sm:$0xff]
    %v32 = vld [vmem:[%s1 + $0x60] sm:$0xff]
    %v33 = vld [vmem:[%s1 + $0x68] sm:$0xff]
    %v34 = vld [vmem:[%s1 + $0x70] sm:$0xff]
    %v35 = vld [vmem:[%s1 + $0x78] sm:$0xff]
    %v36 = vld [vmem:[%s1 + $0x80] sm:$0xff]
    %v37 = vld [vmem:[%s1 + $0x88] sm:$0xff]
    %v38 = vld [vmem:[%s1 + $0x90] sm:$0xff]
    %v39 = vld [vmem:[%s1 + $0x98] sm:$0xff]
    %v40 = vld [vmem:[%s1 + $0xa0] sm:$0xff]
    %v41 = vld [vmem:[%s1 + $0xa8] sm:$0xff]
    %v42 = vld [vmem:[%s1 + $0xb0] sm:$0xff]
    %v43 = vld [vmem:[%s1 + $0xb8] sm:$0xff]
    %v44 = vld [vmem:[%s1 + $0xc0] sm:$0xff]
    %v45 = vld [vmem:[%s1 + $0xc8] sm:$0xff]
    %v46 = vld [vmem:[%s1 + $0xd0] sm:$0xff]
    %v47 = vld [vmem:[%s1 + $0xd8] sm:$0xff]
    %v48 = vld [vmem:[%s1 + $0xe0] sm:$0xff]
    %v49 = vld [vmem:[%s1 + $0xe8] sm:$0xff]
    %v50 = vld [vmem:[%s1 + $0xf0] sm:$0xff]
    %v51 = vld [vmem:[%s1 + $0xf8] sm:$0xff]
    %v52 = vld [vmem:[%s1 + $0x100] sm:$0xff]
    %v53 = vld [vmem:[%s1 + $0x108] sm:$0xff]
    %v54 = vld [vmem:[%s1 + $0x110] sm:$0xff]
    %v55 = vld [vmem:[%s1 + $0x118] sm:$0xff]
    %v56 = vld [vmem:[%s1 + $0x120] sm:$0xff]
    %v57 = vld [vmem:[%s1 + $0x128] sm:$0xff]
    %v58 = vld [vmem:[%s1 + $0x130] sm:$0xff]
    %v59 = vld [vmem:[%s1 + $0x138] sm:$0xff]
    %v60 = vld [vmem:[%s1 + $0x140] sm:$0xff]
    %v61 = vld [vmem:[%s1 + $0x148] sm:$0xff]
    %v62 = vld [vmem:[%s1 + $0x150] sm:$0xff]
    %v63 = vld [vmem:[%s1 + $0x158] sm:$0xff]
    %v64 = vld [vmem:[%s1 + $0x160] sm:$0xff]
    %v65 = vld [vmem:[%s1 + $0x168] sm:$0xff]
    %v66 = vld [vmem:[%s1 + $0x170] sm:$0xff]
    %v67 = vld [vmem:[%s1 + $0x178] sm:$0xff]
    %v68 = vld [vmem:[%s1 + $0x180] sm:$0xff]
    %v69 = vld [vmem:[%s1 + $0x188] sm:$0xff]
    %v70 = vld [vmem:[%s1 + $0x190] sm:$0xff]
    %v71 = vld [vmem:[%s1 + $0x198] sm:$0xff]
    %v72 = vld [vmem:[%s1 + $0x1a0] sm:$0xff]
    %v73 = vld [vmem:[%s1 + $0x1a8] sm:$0xff]
    %v74 = vld [vmem:[%s1 + $0x1b0] sm:$0xff]
    %v75 = vld [vmem:[%s1 + $0x1b8] sm:$0xff]
    %v76 = vld [vmem:[%s1 + $0x1c0] sm:$0xff]
    %v77 = vld [vmem:[%s1 + $0x1c8] sm:$0xff]
    %v78 = vld [vmem:[%s1 + $0x1d0] sm:$0xff]
    %v79 = vld [vmem:[%s1 + $0x1d8] sm:$0xff]
    %v80 = vld [vmem:[%s1 + $0x1e0] sm:$0xff]
    %v81 = vld [vmem:[%s1 + $0x1e8] sm:$0xff]
    %v82 = vld [vmem:[%s1 + $0x1f0] sm:$0xff]
    %v83 = vld [vmem:[%s1 + $0x1f8] sm:$0xff]
    %v84 = vld [vmem:[%s1 + $0x200] sm:$0xff]
    %v85 = vld [vmem:[%s1 + $0x208] sm:$0xff]
    %v86 = vld [vmem:[%s1 + $0x210] sm:$0xff]
    %v87 = vld [vmem:[%s1 + $0x218] sm:$0xff]
    %v88 = vld [vmem:[%s1 + $0x220] sm:$0xff]
    %v89 = vld [vmem:[%s1 + $0x228] sm:$0xff]
    %v90 = vld [vmem:[%s1 + $0x230] sm:$0xff]
    %v91 = vld [vmem:[%s1 + $0x238] sm:$0xff]
    %v92 = vld [vmem:[%s1 + $0x240] sm:$0xff]
    %v93 = vld [vmem:[%s1 + $0x248] sm:$0xff]
    %v94 = vld [vmem:[%s1 + $0x250] sm:$0xff]
    %v95 = vld [vmem:[%s1 + $0x258] sm:$0xff]
    %v96 = vld [vmem:[%s1 + $0x260] sm:$0xff]
    %v97 = vld [vmem:[%s1 + $0x268] sm:$0xff]
    %v98 = vld [vmem:[%s1 + $0x270] sm:$0xff]
    %v99 = vld [vmem:[%s1 + $0x278] sm:$0xff]
    %v100 = vld [vmem:[%s1 + $0x280] sm:$0xff]
    %v101 = vld [vmem:[%s1 + $0x288] sm:$0xff]
    %v102 = vld [vmem:[%s1 + $0x290] sm:$0xff]
    %v103 = vld [vmem:[%s1 + $0x298] sm:$0xff]
    %v104 = vld [vmem:[%s1 + $0x2a0] sm:$0xff]
    %v105 = vld [vmem:[%s1 + $0x2a8] sm:$0xff]
    %v106 = vld [vmem:[%s1 + $0x2b0] sm:$0xff]
    %v107 = vld [vmem:[%s1 + $0x2b8] sm:$0xff]
    %v108 = vld [vmem:[%s1 + $0x2c0] sm:$0xff]
    %v109 = vld [vmem:[%s1 + $0x2c8] sm:$0xff]
    %v110 = vld [vmem:[%s1 + $0x2d0] sm:$0xff]
    %v111 = vld [vmem:[%s1 + $0x2d8] sm:$0xff]
    %v112 = vld [vmem:[%s1 + $0x2e0] sm:$0xff]
    %v113 = vld [vmem:[%s1 + $0x2e8] sm:$0xff]
    %v114 = vld [vmem:[%s1 + $0x2f0] sm:$0xff]
    %v115 = vld [vmem:[%s1 + $0x2f8] sm:$0xff]
    %v116 = vld [vmem:[%s1 + $0x300] sm:$0xff]
    %v117 = vld [vmem:[%s1 + $0x308] sm:$0xff]
    %v118 = vld [vmem:[%s1 + $0x310] sm:$0xff]
    %v119 = vld [vmem:[%s1 + $0x318] sm:$0xff]
    %v120 = vld [vmem:[%s1 + $0x320] sm:$0xff]
    %v121 = vld [vmem:[%s1 + $0x328] sm:$0xff]
    %v122 = vld [vmem:[%s1 + $0x330] sm:$0xff]
    %v123 = vld [vmem:[%s1 + $0x338] sm:$0xff]
    %v124 = vld [vmem:[%s1 + $0x340] sm:$0xff]
    %v125 = vld [vmem:[%s1 + $0x348] sm:$0xff]
    %v126 = vld [vmem:[%s1 + $0x350] sm:$0xff]
    %v127 = vld [vmem:[%s1 + $0x358] sm:$0xff]
    %v128 = vld [vmem:[%s1 + $0x360] sm:$0xff]
    %v129 = vld [vmem:[%s1 + $0x368] sm:$0xff]
    %v130 = vld [vmem:[%s1 + $0x370] sm:$0xff]
    %v131 = vld [vmem:[%s1 + $0x378] sm:$0xff]
    %v132 = vld [vmem:[%s1 + $0x380] sm:$0xff]
    %v133 = vld [vmem:[%s1 + $0x388] sm:$0xff]
    %v134 = vld [vmem:[%s1 + $0x390] sm:$0xff]
    %v135 = vld [vmem:[%s1 + $0x398] sm:$0xff]
    %v136 = vld [vmem:[%s1 + $0x3a0] sm:$0xff]
    %v137 = vld [vmem:[%s1 + $0x3a8] sm:$0xff]
    %v138 = vld [vmem:[%s1 + $0x3b0] sm:$0xff]
    %v139 = vld [vmem:[%s1 + $0x3b8] sm:$0xff]
    %v140 = vld [vmem:[%s1 + $0x3c0] sm:$0xff]
    %v141 = vld [vmem:[%s1 + $0x3c8] sm:$0xff]
    %v142 = vld [vmem:[%s1 + $0x3d0] sm:$0xff]
    %v143 = vld [vmem:[%s1 + $0x3d8] sm:$0xff]
    %v144 = vld [vmem:[%s1 + $0x3e0] sm:$0xff]
    %v145 = vld [vmem:[%s1 + $0x3e8] sm:$0xff]
    %v146 = vld [vmem:[%s1 + $0x3f0] sm:$0xff]
    %v147 = vld [vmem:[%s1 + $0x3f8] sm:$0xff]
    %v148 = vld [vmem:[%s2] sm:$0x1]
    %v149 = vlaneseq
    %v150 = vshrl.u32 %v149, 7
    %v151 = vsub.s32 0, %v150
    %v152 = vrot.slane %v148, %v151
    %v155 = vcombine.high %v18, %v18
    %v157 = vunpack.c.l.s4 1983009808
    %v158 = vunpack.c.0.s8 %v157
    %v159 = vlaneseq
    %v160 = vshrl.u32 %v159, 7
    %v161 = vsub.s32 %v158, %v160
    %v162 = vrot.slane %v18, %v161
    %v164 = vunpack.c.l.s4 1983009808
    %v165 = vunpack.c.0.s8 %v164
    %v166 = vlaneseq
    %v167 = vshrl.u32 %v166, 7
    %v168 = vsub.s32 %v165, %v167
    %v169 = vrot.slane %v155, %v168
    %v170 = vcombine.high %v162, %v162
    %v171 = vcombine.high %v169, %v169
    %v172 = vcombine.high %v19, %v19
    %v174 = vunpack.c.l.s4 1983009808
    %v175 = vunpack.c.0.s8 %v174
    %v176 = vlaneseq
    %v177 = vshrl.u32 %v176, 7
    %v178 = vsub.s32 %v175, %v177
    %v179 = vrot.slane %v19, %v178
    %v181 = vunpack.c.l.s4 1983009808
    %v182 = vunpack.c.0.s8 %v181
    %v183 = vlaneseq
    %v184 = vshrl.u32 %v183, 7
    %v185 = vsub.s32 %v182, %v184
    %v186 = vrot.slane %v172, %v185
    %v187 = vcombine.high %v179, %v179
    %v188 = vcombine.high %v186, %v186
    %197 = vmatprep.subr.mxu0 0.0
    %198 = vmatpush1.msra.mxu0 %v20
    %199 = vmatprep.subr.mxu0 0.0
    %200 = vmatpush1.msra.mxu0 %v21
    %201 = vmatprep.subr.mxu0 0.0
    %202 = vmatpush1.msra.mxu0 %v22
    %203 = vmatprep.subr.mxu0 0.0
    %204 = vmatpush1.msra.mxu0 %v23
    %205 = vmatprep.subr.mxu0 0.0
    %206 = vmatpush1.msra.mxu0 %v24
    %207 = vmatprep.subr.mxu0 0.0
    %208 = vmatpush1.msra.mxu0 %v25
    %209 = vmatprep.subr.mxu0 0.0
    %210 = vmatpush1.msra.mxu0 %v26
    %211 = vmatprep.subr.mxu0 0.0
    %212 = vmatpush1.msra.mxu0 %v27
    %213 = vmatprep.subr.mxu0 0.0
    %214 = vmatpush1.msra.mxu0 %v28
    %215 = vmatprep.subr.mxu0 0.0
    %216 = vmatpush1.msra.mxu0 %v29
    %217 = vmatprep.subr.mxu0 0.0
    %218 = vmatpush1.msra.mxu0 %v30
    %219 = vmatprep.subr.mxu0 0.0
    %220 = vmatpush1.msra.mxu0 %v31
    %221 = vmatprep.subr.mxu0 0.0
    %222 = vmatpush1.msra.mxu0 %v32
    %223 = vmatprep.subr.mxu0 0.0
    %224 = vmatpush1.msra.mxu0 %v33
    %225 = vmatprep.subr.mxu0 0.0
    %226 = vmatpush1.msra.mxu0 %v34
    %227 = vmatprep.subr.mxu0 0.0
    %228 = vmatpush1.msra.mxu0 %v35
    %229 = vmatprep.subr.mxu0 0.0
    %230 = vmatpush1.msra.mxu0 %v36
    %231 = vmatprep.subr.mxu0 0.0
    %232 = vmatpush1.msra.mxu0 %v37
    %233 = vmatprep.subr.mxu0 0.0
    %234 = vmatpush1.msra.mxu0 %v38
    %235 = vmatprep.subr.mxu0 0.0
    %236 = vmatpush1.msra.mxu0 %v39
    %237 = vmatprep.subr.mxu0 0.0
    %238 = vmatpush1.msra.mxu0 %v40
    %239 = vmatprep.subr.mxu0 0.0
    %240 = vmatpush1.msra.mxu0 %v41
    %241 = vmatprep.subr.mxu0 0.0
    %242 = vmatpush1.msra.mxu0 %v42
    %243 = vmatprep.subr.mxu0 0.0
    %244 = vmatpush1.msra.mxu0 %v43
    %245 = vmatprep.subr.mxu0 0.0
    %246 = vmatpush1.msra.mxu0 %v44
    %247 = vmatprep.subr.mxu0 0.0
    %248 = vmatpush1.msra.mxu0 %v45
    %249 = vmatprep.subr.mxu0 0.0
    %250 = vmatpush1.msra.mxu0 %v46
    %251 = vmatprep.subr.mxu0 0.0
    %252 = vmatpush1.msra.mxu0 %v47
    %253 = vmatprep.subr.mxu0 0.0
    %254 = vmatpush1.msra.mxu0 %v48
    %255 = vmatprep.subr.mxu0 0.0
    %256 = vmatpush1.msra.mxu0 %v49
    %257 = vmatprep.subr.mxu0 0.0
    %258 = vmatpush1.msra.mxu0 %v50
    %259 = vmatprep.subr.mxu0 0.0
    %260 = vmatpush1.msra.mxu0 %v51
    %261 = vmatprep.mubr.f32.mxu0 %v170
    %262 = vmatmul.mubr.f32.gmra.mrb[0].mxu0 %v162
    %v263 = vpop.f32.mrb[0].mxu0
    %v264 = vadd.f32 %v152, %v263
    %v265 = vpop.f32.mrb[0].mxu0
    %266 = vdwg.mxu0
    %267 = vmatprep.subr.mxu0 0.0
    %268 = vmatpush1.msra.mxu0 %v52
    %269 = vmatprep.subr.mxu0 0.0
    %270 = vmatpush1.msra.mxu0 %v53
    %271 = vmatprep.subr.mxu0 0.0
    %272 = vmatpush1.msra.mxu0 %v54
    %273 = vmatprep.subr.mxu0 0.0
    %274 = vmatpush1.msra.mxu0 %v55
    %275 = vmatprep.subr.mxu0 0.0
    %276 = vmatpush1.msra.mxu0 %v56
    %277 = vmatprep.subr.mxu0 0.0
    %278 = vmatpush1.msra.mxu0 %v57
    %279 = vmatprep.subr.mxu0 0.0
    %280 = vmatpush1.msra.mxu0 %v58
    %281 = vmatprep.subr.mxu0 0.0
    %282 = vmatpush1.msra.mxu0 %v59
    %283 = vmatprep.subr.mxu0 0.0
    %284 = vmatpush1.msra.mxu0 %v60
    %285 = vmatprep.subr.mxu0 0.0
    %286 = vmatpush1.msra.mxu0 %v61
    %287 = vmatprep.subr.mxu0 0.0
    %288 = vmatpush1.msra.mxu0 %v62
    %289 = vmatprep.subr.mxu0 0.0
    %290 = vmatpush1.msra.mxu0 %v63
    %291 = vmatprep.subr.mxu0 0.0
    %292 = vmatpush1.msra.mxu0 %v64
    %293 = vmatprep.subr.mxu0 0.0
    %294 = vmatpush1.msra.mxu0 %v65
    %295 = vmatprep.subr.mxu0 0.0
    %296 = vmatpush1.msra.mxu0 %v66
    %297 = vmatprep.subr.mxu0 0.0
    %298 = vmatpush1.msra.mxu0 %v67
    %299 = vmatprep.subr.mxu0 0.0
    %300 = vmatpush1.msra.mxu0 %v68
    %301 = vmatprep.subr.mxu0 0.0
    %302 = vmatpush1.msra.mxu0 %v69
    %303 = vmatprep.subr.mxu0 0.0
    %304 = vmatpush1.msra.mxu0 %v70
    %305 = vmatprep.subr.mxu0 0.0
    %306 = vmatpush1.msra.mxu0 %v71
    %307 = vmatprep.subr.mxu0 0.0
    %308 = vmatpush1.msra.mxu0 %v72
    %309 = vmatprep.subr.mxu0 0.0
    %310 = vmatpush1.msra.mxu0 %v73
    %311 = vmatprep.subr.mxu0 0.0
    %312 = vmatpush1.msra.mxu0 %v74
    %313 = vmatprep.subr.mxu0 0.0
    %314 = vmatpush1.msra.mxu0 %v75
    %315 = vmatprep.subr.mxu0 0.0
    %316 = vmatpush1.msra.mxu0 %v76
    %317 = vmatprep.subr.mxu0 0.0
    %318 = vmatpush1.msra.mxu0 %v77
    %319 = vmatprep.subr.mxu0 0.0
    %320 = vmatpush1.msra.mxu0 %v78
    %321 = vmatprep.subr.mxu0 0.0
    %322 = vmatpush1.msra.mxu0 %v79
    %323 = vmatprep.subr.mxu0 0.0
    %324 = vmatpush1.msra.mxu0 %v80
    %325 = vmatprep.subr.mxu0 0.0
    %326 = vmatpush1.msra.mxu0 %v81
    %327 = vmatprep.subr.mxu0 0.0
    %328 = vmatpush1.msra.mxu0 %v82
    %329 = vmatprep.subr.mxu0 0.0
    %330 = vmatpush1.msra.mxu0 %v83
    %331 = vmatprep.mubr.f32.mxu0 %v171
    %332 = vmatmul.mubr.f32.gmra.mrb[0].mxu0 %v169
    %v333 = vpop.f32.mrb[0].mxu0
    %v334 = vadd.f32 %v264, %v333
    %v335 = vpop.f32.mrb[0].mxu0
    %336 = vdwg.mxu0
    %337 = vmatprep.subr.mxu0 0.0
    %338 = vmatpush1.msra.mxu0 %v84
    %339 = vmatprep.subr.mxu0 0.0
    %340 = vmatpush1.msra.mxu0 %v85
    %341 = vmatprep.subr.mxu0 0.0
    %342 = vmatpush1.msra.mxu0 %v86
    %343 = vmatprep.subr.mxu0 0.0
    %344 = vmatpush1.msra.mxu0 %v87
    %345 = vmatprep.subr.mxu0 0.0
    %346 = vmatpush1.msra.mxu0 %v88
    %347 = vmatprep.subr.mxu0 0.0
    %348 = vmatpush1.msra.mxu0 %v89
    %349 = vmatprep.subr.mxu0 0.0
    %350 = vmatpush1.msra.mxu0 %v90
    %351 = vmatprep.subr.mxu0 0.0
    %352 = vmatpush1.msra.mxu0 %v91
    %353 = vmatprep.subr.mxu0 0.0
    %354 = vmatpush1.msra.mxu0 %v92
    %355 = vmatprep.subr.mxu0 0.0
    %356 = vmatpush1.msra.mxu0 %v93
    %357 = vmatprep.subr.mxu0 0.0
    %358 = vmatpush1.msra.mxu0 %v94
    %359 = vmatprep.subr.mxu0 0.0
    %360 = vmatpush1.msra.mxu0 %v95
    %361 = vmatprep.subr.mxu0 0.0
    %362 = vmatpush1.msra.mxu0 %v96
    %363 = vmatprep.subr.mxu0 0.0
    %364 = vmatpush1.msra.mxu0 %v97
    %365 = vmatprep.subr.mxu0 0.0
    %366 = vmatpush1.msra.mxu0 %v98
    %367 = vmatprep.subr.mxu0 0.0
    %368 = vmatpush1.msra.mxu0 %v99
    %369 = vmatprep.subr.mxu0 0.0
    %370 = vmatpush1.msra.mxu0 %v100
    %371 = vmatprep.subr.mxu0 0.0
    %372 = vmatpush1.msra.mxu0 %v101
    %373 = vmatprep.subr.mxu0 0.0
    %374 = vmatpush1.msra.mxu0 %v102
    %375 = vmatprep.subr.mxu0 0.0
    %376 = vmatpush1.msra.mxu0 %v103
    %377 = vmatprep.subr.mxu0 0.0
    %378 = vmatpush1.msra.mxu0 %v104
    %379 = vmatprep.subr.mxu0 0.0
    %380 = vmatpush1.msra.mxu0 %v105
    %381 = vmatprep.subr.mxu0 0.0
    %382 = vmatpush1.msra.mxu0 %v106
    %383 = vmatprep.subr.mxu0 0.0
    %384 = vmatpush1.msra.mxu0 %v107
    %385 = vmatprep.subr.mxu0 0.0
    %386 = vmatpush1.msra.mxu0 %v108
    %387 = vmatprep.subr.mxu0 0.0
    %388 = vmatpush1.msra.mxu0 %v109
    %389 = vmatprep.subr.mxu0 0.0
    %390 = vmatpush1.msra.mxu0 %v110
    %391 = vmatprep.subr.mxu0 0.0
    %392 = vmatpush1.msra.mxu0 %v111
    %393 = vmatprep.subr.mxu0 0.0
    %394 = vmatpush1.msra.mxu0 %v112
    %395 = vmatprep.subr.mxu0 0.0
    %396 = vmatpush1.msra.mxu0 %v113
    %397 = vmatprep.subr.mxu0 0.0
    %398 = vmatpush1.msra.mxu0 %v114
    %399 = vmatprep.subr.mxu0 0.0
    %400 = vmatpush1.msra.mxu0 %v115
    %401 = vmatprep.mubr.f32.mxu0 %v187
    %402 = vmatmul.mubr.f32.gmra.mrb[0].mxu0 %v179
    %v403 = vpop.f32.mrb[0].mxu0
    %v404 = vadd.f32 %v334, %v403
    %v405 = vpop.f32.mrb[0].mxu0
    %406 = vdwg.mxu0
    %407 = vmatprep.subr.mxu0 0.0
    %408 = vmatpush1.msra.mxu0 %v116
    %409 = vmatprep.subr.mxu0 0.0
    %410 = vmatpush1.msra.mxu0 %v117
    %411 = vmatprep.subr.mxu0 0.0
    %412 = vmatpush1.msra.mxu0 %v118
    %413 = vmatprep.subr.mxu0 0.0
    %414 = vmatpush1.msra.mxu0 %v119
    %415 = vmatprep.subr.mxu0 0.0
    %416 = vmatpush1.msra.mxu0 %v120
    %417 = vmatprep.subr.mxu0 0.0
    %418 = vmatpush1.msra.mxu0 %v121
    %419 = vmatprep.subr.mxu0 0.0
    %420 = vmatpush1.msra.mxu0 %v122
    %421 = vmatprep.subr.mxu0 0.0
    %422 = vmatpush1.msra.mxu0 %v123
    %423 = vmatprep.subr.mxu0 0.0
    %424 = vmatpush1.msra.mxu0 %v124
    %425 = vmatprep.subr.mxu0 0.0
    %426 = vmatpush1.msra.mxu0 %v125
    %427 = vmatprep.subr.mxu0 0.0
    %428 = vmatpush1.msra.mxu0 %v126
    %429 = vmatprep.subr.mxu0 0.0
    %430 = vmatpush1.msra.mxu0 %v127
    %431 = vmatprep.subr.mxu0 0.0
    %432 = vmatpush1.msra.mxu0 %v128
    %433 = vmatprep.subr.mxu0 0.0
    %434 = vmatpush1.msra.mxu0 %v129
    %435 = vmatprep.subr.mxu0 0.0
    %436 = vmatpush1.msra.mxu0 %v130
    %437 = vmatprep.subr.mxu0 0.0
    %438 = vmatpush1.msra.mxu0 %v131
    %439 = vmatprep.subr.mxu0 0.0
    %440 = vmatpush1.msra.mxu0 %v132
    %441 = vmatprep.subr.mxu0 0.0
    %442 = vmatpush1.msra.mxu0 %v133
    %443 = vmatprep.subr.mxu0 0.0
    %444 = vmatpush1.msra.mxu0 %v134
    %445 = vmatprep.subr.mxu0 0.0
    %446 = vmatpush1.msra.mxu0 %v135
    %447 = vmatprep.subr.mxu0 0.0
    %448 = vmatpush1.msra.mxu0 %v136
    %449 = vmatprep.subr.mxu0 0.0
    %450 = vmatpush1.msra.mxu0 %v137
    %451 = vmatprep.subr.mxu0 0.0
    %452 = vmatpush1.msra.mxu0 %v138
    %453 = vmatprep.subr.mxu0 0.0
    %454 = vmatpush1.msra.mxu0 %v139
    %455 = vmatprep.subr.mxu0 0.0
    %456 = vmatpush1.msra.mxu0 %v140
    %457 = vmatprep.subr.mxu0 0.0
    %458 = vmatpush1.msra.mxu0 %v141
    %459 = vmatprep.subr.mxu0 0.0
    %460 = vmatpush1.msra.mxu0 %v142
    %461 = vmatprep.subr.mxu0 0.0
    %462 = vmatpush1.msra.mxu0 %v143
    %463 = vmatprep.subr.mxu0 0.0
    %464 = vmatpush1.msra.mxu0 %v144
    %465 = vmatprep.subr.mxu0 0.0
    %466 = vmatpush1.msra.mxu0 %v145
    %467 = vmatprep.subr.mxu0 0.0
    %468 = vmatpush1.msra.mxu0 %v146
    %469 = vmatprep.subr.mxu0 0.0
    %470 = vmatpush1.msra.mxu0 %v147
    %471 = vmatprep.mubr.f32.mxu0 %v188
    %472 = vmatmul.mubr.f32.gmra.mrb[0].mxu0 %v186
    %v473 = vpop.f32.mrb[0].mxu0
    %v474 = vadd.f32 %v404, %v473
    %v475 = vpop.f32.mrb[0].mxu0
    %476 = vdwg.mxu0
    %v477 = vxor.u32 %v474, 2147483648
    %v478 = vmul.f32 %v477, 1.442695
    %v479 = vpow.pop %v478
    %v480 = vadd.f32 %v479, 1.0
    %v481 = vrcp.pop %v480
    %v482 = vmul.f32 1.0, %v481
    %v483 = vld [vmem:[%s2 + $0x1] sm:$0x1]
    %v484 = vlaneseq
    %v485 = vshrl.u32 %v484, 7
    %v486 = vsub.s32 0, %v485
    %v487 = vrot.slane %v483, %v486
    %v488 = vmul.f32 %v487, %v482
    %v489 = vld [vmem:[%s2 + $0x2] sm:$0x1]
    %v490 = vlaneseq
    %v491 = vshrl.u32 %v490, 7
    %v492 = vsub.s32 0, %v491
    %v493 = vrot.slane %v489, %v492
    %v494 = vadd.f32 %v488, %v493
    %v495 = vmax.f32 %v494, 0.0
    %v496 = vld [vmem:[%s2 + $0x3] sm:$0x1]
    %v497 = vlaneseq
    %v498 = vshrl.u32 %v497, 7
    %v499 = vsub.s32 0, %v498
    %v500 = vrot.slane %v496, %v499
    %v501 = vmul.f32 %v500, %v482
    %v502 = vld [vmem:[%s2 + $0x4] sm:$0x1]
    %v503 = vlaneseq
    %v504 = vshrl.u32 %v503, 7
    %v505 = vsub.s32 0, %v504
    %v506 = vrot.slane %v502, %v505
    %v507 = vadd.f32 %v501, %v506
    %v508 = vmax.f32 %v507, 0.0
    %v509 = vmin.f32 %v495, %v508
    %v510 = vld [vmem:[%s3] sm:$0xff]
    %v511 = vld [vmem:[%s3 + $0x8] sm:$0xff]
    %v512 = vld [vmem:[%s3 + $0x10] sm:$0xff]
    %v513 = vld [vmem:[%s3 + $0x18] sm:$0xff]
    %v514 = vld [vmem:[%s3 + $0x20] sm:$0xff]
    %v515 = vld [vmem:[%s3 + $0x28] sm:$0xff]
    %v516 = vld [vmem:[%s3 + $0x30] sm:$0xff]
    %v517 = vld [vmem:[%s3 + $0x38] sm:$0xff]
    %v518 = vld [vmem:[%s3 + $0x40] sm:$0xff]
    %vm519 = vcmask 588800
    %v521 = vsel %vm519, %v509, 0
    %523 = vmatprep.subr.mxu0 0.0
    %524 = vmatpush1.msra.mxu0 %v510
    %525 = vmatprep.subr.mxu0 0.0
    %526 = vmatpush1.msra.mxu0 %v511
    %527 = vmatprep.subr.mxu0 0.0
    %528 = vmatpush1.msra.mxu0 %v512
    %529 = vmatprep.subr.mxu0 0.0
    %530 = vmatpush1.msra.mxu0 %v513
    %531 = vmatprep.subr.mxu0 0.0
    %532 = vmatpush1.msra.mxu0 %v514
    %533 = vmatprep.subr.mxu0 0.0
    %534 = vmatpush1.msra.mxu0 %v515
    %535 = vmatprep.subr.mxu0 0.0
    %536 = vmatpush1.msra.mxu0 %v516
    %537 = vmatprep.subr.mxu0 0.0
    %538 = vmatpush1.msra.mxu0 %v517
    %539 = vmatprep.subr.mxu0 0.0
    %540 = vmatpush1.msra.mxu0 %v518
    %541 = vmatprep.subr.mxu0 0.0
    %542 = vmatpush1.msra.mxu0 0.0
    %543 = vmatprep.subr.mxu0 0.0
    %544 = vmatpush1.msra.mxu0 0.0
    %545 = vmatprep.subr.mxu0 0.0
    %546 = vmatpush1.msra.mxu0 0.0
    %547 = vmatprep.subr.mxu0 0.0
    %548 = vmatpush1.msra.mxu0 0.0
    %549 = vmatprep.subr.mxu0 0.0
    %550 = vmatpush1.msra.mxu0 0.0
    %551 = vmatprep.subr.mxu0 0.0
    %552 = vmatpush1.msra.mxu0 0.0
    %553 = vmatprep.subr.mxu0 0.0
    %554 = vmatpush1.msra.mxu0 0.0
    %555 = vmatprep.subr.mxu0 0.0
    %556 = vmatpush1.msra.mxu0 0.0
    %557 = vmatprep.subr.mxu0 0.0
    %558 = vmatpush1.msra.mxu0 0.0
    %559 = vmatprep.subr.mxu0 0.0
    %560 = vmatpush1.msra.mxu0 0.0
    %561 = vmatprep.subr.mxu0 0.0
    %562 = vmatpush1.msra.mxu0 0.0
    %563 = vmatprep.subr.mxu0 0.0
    %564 = vmatpush1.msra.mxu0 0.0
    %565 = vmatprep.subr.mxu0 0.0
    %566 = vmatpush1.msra.mxu0 0.0
    %567 = vmatprep.subr.mxu0 0.0
    %568 = vmatpush1.msra.mxu0 0.0
    %569 = vmatprep.subr.mxu0 0.0
    %570 = vmatpush1.msra.mxu0 0.0
    %571 = vmatprep.subr.mxu0 0.0
    %572 = vmatpush1.msra.mxu0 0.0
    %573 = vmatprep.subr.mxu0 0.0
    %574 = vmatpush1.msra.mxu0 0.0
    %575 = vmatprep.subr.mxu0 0.0
    %576 = vmatpush1.msra.mxu0 0.0
    %577 = vmatprep.subr.mxu0 0.0
    %578 = vmatpush1.msra.mxu0 0.0
    %579 = vmatprep.subr.mxu0 0.0
    %580 = vmatpush1.msra.mxu0 0.0
    %581 = vmatprep.subr.mxu0 0.0
    %582 = vmatpush1.msra.mxu0 0.0
    %583 = vmatprep.subr.mxu0 0.0
    %584 = vmatpush1.msra.mxu0 0.0
    %585 = vmatprep.subr.mxu0 0.0
    %586 = vmatpush1.msra.mxu0 0.0
    %587 = vmatprep.mubr.f32.mxu0 0.0
    %588 = vmatmul.mubr.f32.gmra.mrb[0].mxu0 %v521
    %v589 = vpop.f32.mrb[0].mxu0
    %v590 = vadd.f32 0.0, %v589
    %v591 = vpop.f32.mrb[0].mxu0
    %592 = vdwg.mxu0
    %593 = vst [vmem:[#allocation2] sm:$0x3] %v590
    // Predicated region
    $region18: #{tpu_custom_call.1} parent=1 // pred_check
      _
    $region19: #{tpu_custom_call.1} parent=1 // pred_check_branch
      %595 = sbr.rel (0) target = $region21
    $region20: #{tpu_custom_call.1} parent=1 // pred_region
      %s597 = ssub.s32 32, 32
      %598 = vsyncadd [#allocation3], %s597
      %s600 = sshll.u32 [#allocation2], 4
      %s601 = int_to_ptr.vmem [resolvable:$true] %s600
      %603 = dma.vmem_to_hbm [thread:$0]  %s601, 32, %s4, [#allocation3]
    $region21: #{tpu_custom_call.1} parent=1 // pred_fallthru
      _
    // Predicated region
    $region22: #{tpu_custom_call.1} parent=1 // pred_check
      _
    $region23: #{tpu_custom_call.1} parent=1 // pred_check_branch
      %605 = sbr.rel (0) target = $region25
    $region24: #{tpu_custom_call.1} parent=1 // pred_region
      %606 = dma.done [#allocation3], 32
    $region25: #{tpu_custom_call.1} parent=1 // pred_fallthru
      _
    %607 = vsyncpa [#allocation3], 1

</llo_original>
